<compile_context>
chip_gen: v6e
topology: v6e:2x2x1
jax: 0.10.0
libtpu: 0.0.40
codegen_flags: <defaults>
</compile_context>

<pallas_src>
import functools

import jax
import jax.numpy as jnp
import numpy as np
from jax import lax
from jax.experimental import pallas as pl
from jax.experimental.pallas import tpu as pltpu


def _round_up(x, m):
    return (x + m - 1) // m * m


def _choose_block_n(n, block_n_max):
    bn = _round_up(n, 8)
    if bn >= block_n_max:
        return block_n_max          # block_n_max is a multiple of 256
    return bn


def _make_kernel(block_n, dim_latent, label_size):
    L = dim_latent
    C = label_size

    def kernel(x_ref,                  # VMEM: (block_n, F) bf16
               lbl_ref,                # VMEM: (block_n, 1) int32
               wts_ref, bts_ref,       # VMEM: (F, 2L) bf16, (1, 2L) f32
               wc_ref, bc_ref,         # VMEM: (L, C) bf16, (1, C) f32
               hid_ref,                # out VMEM: (block_n, 2L) f32
               ce_ref, l1_ref, mse_ref):  # out VMEM: (block_n, 1) f32 each
        # Fused teacher|student first layer: one lane-dense GEMM.
        # TODO(synk): TeacherModel / StudentModel definitions are not provided
        # in the reference; assumed Linear(feature_dim, dim_latent) + ReLU.
        hid = jnp.dot(x_ref[...], wts_ref[...],
                      preferred_element_type=jnp.float32)
        hid = jnp.maximum(hid + bts_ref[...], 0.0)            # (bn, 2L) f32

        # Lane-dense store of the full hidden slab (teacher_x sliced outside).
        hid_ref[...] = hid

        teacher_x = hid[:, :L]
        student_x = hid[:, L:]

        # Shared classifier applied to both heads (no zero-padded block-diag).
        wc = wc_ref[...]
        bc = bc_ref[...]
        t_logits = jnp.dot(teacher_x.astype(jnp.bfloat16), wc,
                           preferred_element_type=jnp.float32) + bc
        s_logits = jnp.dot(student_x.astype(jnp.bfloat16), wc,
                           preferred_element_type=jnp.float32) + bc

        # Softmaxes: teacher hard/soft share one row max (max(z/2) = max(z)/2).
        m_t = jnp.max(t_logits, axis=-1, keepdims=True)
        m_s = jnp.max(s_logits, axis=-1, keepdims=True)
        e_hard = jnp.exp(t_logits - m_t)
        e_tsoft = jnp.exp(0.5 * (t_logits - m_t))
        e_ssoft = jnp.exp(0.5 * (s_logits - m_s))

        # Exact normalization for the CE path (error would compound through
        # the following exp/log); approx (EUP) reciprocal for the soft heads.
        teacher_hard = e_hard / jnp.sum(e_hard, axis=-1, keepdims=True)
        teacher_soft = e_tsoft * pl.reciprocal(
            jnp.sum(e_tsoft, axis=-1, keepdims=True), approx=True)
        student_soft = e_ssoft * pl.reciprocal(
            jnp.sum(e_ssoft, axis=-1, keepdims=True), approx=True)

        # F.cross_entropy(teacher_hard_result, node_label): PyTorch applies
        # log_softmax to its *input* (here: already-softmaxed probabilities).
        zc = teacher_hard - jnp.max(teacher_hard, axis=-1, keepdims=True)
        logz = jnp.log(jnp.sum(jnp.exp(zc), axis=-1, keepdims=True))
        log_probs = zc - logz                                  # (bn, C)
        onehot = (lax.broadcasted_iota(jnp.int32, (block_n, C), 1)
                  == lbl_ref[...]).astype(jnp.float32)

        # Per-row loss partials; padded rows are sliced away in the wrapper,
        # so no in-kernel masking (and no cross-iteration accumulators).
        ce_ref[...] = -jnp.sum(onehot * log_probs, axis=-1, keepdims=True)
        l1_ref[...] = jnp.sum(jnp.abs(teacher_soft - student_soft),
                              axis=-1, keepdims=True)
        mse_ref[...] = jnp.sum((student_x - teacher_x) ** 2,
                               axis=-1, keepdims=True)

    return kernel


@functools.partial(jax.jit, static_argnames=("block_n_max",))
def feature_extractor_forward(features, meta_label, nodes, params,
                              block_n_max=512):
    """Teacher/student/classifier + losses fused in one Pallas kernel."""
    n = nodes.shape[0]
    feat_dim = features.shape[1]
    L = params["wt"].shape[1]
    C = params["wc"].shape[1]

    block_n = _choose_block_n(n, block_n_max)
    n_pad = _round_up(n, block_n)
    num_blocks = n_pad // block_n
    pad = n_pad - n

    nodes_i = nodes.astype(jnp.int32)

    # Row gather in the wrapper (one lane-dense streamed input for the kernel)
    # and a single bf16 cast of the gathered activations.
    x = features[nodes_i].astype(jnp.bfloat16)                # (n, F)
    labels = meta_label[nodes_i].astype(jnp.int32)[:, None]   # (n, 1)
    if pad:
        x = jnp.pad(x, ((0, pad), (0, 0)))
        labels = jnp.pad(labels, ((0, pad), (0, 0)))

    # Fused first-layer weight [wt | ws]; classifier weight stays un-padded.
    w_ts = jnp.concatenate([params["wt"], params["ws"]],
                           axis=1).astype(jnp.bfloat16)       # (F, 2L)
    b_ts = jnp.concatenate([params["bt"], params["bs"]],
                           axis=1).astype(jnp.float32)        # (1, 2L)
    wc = params["wc"].astype(jnp.bfloat16)                    # (L, C)
    bc = params["bc"].astype(jnp.float32)                     # (1, C)

    kernel = _make_kernel(block_n, L, C)

    in_specs = [
        pl.BlockSpec((block_n, feat_dim), lambda i: (i, 0)),   # x
        pl.BlockSpec((block_n, 1), lambda i: (i, 0)),          # labels
        pl.BlockSpec((feat_dim, 2 * L), lambda i: (0, 0)),     # w_ts
        pl.BlockSpec((1, 2 * L), lambda i: (0, 0)),            # b_ts
        pl.BlockSpec((L, C), lambda i: (0, 0)),                # wc
        pl.BlockSpec((1, C), lambda i: (0, 0)),                # bc
    ]
    out_specs = [
        pl.BlockSpec((block_n, 2 * L), lambda i: (i, 0)),      # hid slab
        pl.BlockSpec((block_n, 1), lambda i: (i, 0)),          # ce per row
        pl.BlockSpec((block_n, 1), lambda i: (i, 0)),          # l1 per row
        pl.BlockSpec((block_n, 1), lambda i: (i, 0)),          # mse per row
    ]
    out_shape = (
        jax.ShapeDtypeStruct((n_pad, 2 * L), jnp.float32),
        jax.ShapeDtypeStruct((n_pad, 1), jnp.float32),
        jax.ShapeDtypeStruct((n_pad, 1), jnp.float32),
        jax.ShapeDtypeStruct((n_pad, 1), jnp.float32),
    )

    hid_out, ce_rows, l1_rows, mse_rows = pl.pallas_call(
        kernel,
        grid=(num_blocks,),
        in_specs=in_specs,
        out_specs=out_specs,
        out_shape=out_shape,
        compiler_params=pltpu.CompilerParams(
            dimension_semantics=("parallel",),
        ),
    )(x, labels, w_ts, b_ts, wc, bc)

    teacher_x = hid_out[:n, :L]
    teacher_loss = jnp.sum(ce_rows[:n, 0]) / n
    l1_loss = jnp.sum(l1_rows[:n, 0]) / (n * C)
    mse_loss = jnp.sum(mse_rows[:n, 0]) / (n * L)
    kd_loss = 0.5 * mse_loss + l1_loss
    return teacher_x, teacher_loss, kd_loss


def init_params(key, feature_dim, dim_latent, label_size):
    ks = jax.random.split(key, 6)
    scale = 0.1
    return {
        "wt": scale * jax.random.normal(ks[0], (feature_dim, dim_latent), jnp.float32),
        "bt": scale * jax.random.normal(ks[1], (1, dim_latent), jnp.float32),
        "ws": scale * jax.random.normal(ks[2], (feature_dim, dim_latent), jnp.float32),
        "bs": scale * jax.random.normal(ks[3], (1, dim_latent), jnp.float32),
        "wc": scale * jax.random.normal(ks[4], (dim_latent, label_size), jnp.float32),
        "bc": scale * jax.random.normal(ks[5], (1, label_size), jnp.float32),
    }


def _reference_forward(features, meta_label, nodes, params):
    """Pure-JAX reference mirroring the PyTorch module (f32 throughout)."""
    x = features[nodes].astype(jnp.float32)
    y = meta_label[nodes].astype(jnp.int32)
    t_x = jax.nn.relu(x @ params["wt"] + params["bt"])
    s_x = jax.nn.relu(x @ params["ws"] + params["bs"])
    t_logit = t_x @ params["wc"] + params["bc"]
    s_logit = s_x @ params["wc"] + params["bc"]
    t_soft = jax.nn.softmax(t_logit / 2.0, axis=-1)
    t_hard = jax.nn.softmax(t_logit, axis=-1)
    s_soft = jax.nn.softmax(s_logit / 2.0, axis=-1)
    logp = jax.nn.log_softmax(t_hard, axis=-1)
    ce = -jnp.mean(jnp.take_along_axis(logp, y[:, None], axis=-1))
    l1 = jnp.mean(jnp.abs(t_soft - s_soft))
    mse = jnp.mean((s_x - t_x) ** 2)
    return t_x, ce, 0.5 * mse + l1


if __name__ == "__main__":
    key = jax.random.PRNGKey(0)
    k_feat, k_param = jax.random.split(key)

    num_nodes_total = 16
    feature_dim = 32
    dim_latent = 64
    label_size = 8          # == len(set(meta_label)) by construction below
    batch = 8

    features = jax.random.normal(k_feat, (num_nodes_total, feature_dim), jnp.float32)
    meta_label = jnp.arange(num_nodes_total, dtype=jnp.int32) % label_size
    nodes = jnp.array([0, 3, 5, 7, 8, 10, 12, 15], dtype=jnp.int32)

    params = init_params(k_param, feature_dim, dim_latent, label_size)

    teacher_x, teacher_loss, kd_loss = feature_extractor_forward(
        features, meta_label, nodes, params)
    jax.block_until_ready((teacher_x, teacher_loss, kd_loss))

    assert teacher_x.shape == (batch, dim_latent)
    assert teacher_loss.shape == () and kd_loss.shape == ()

    # Loose-tolerance check vs. the f32 pure-JAX reference (kernel uses bf16
    # matmul operands and an approximate softmax reciprocal for the soft heads).
    ref_tx, ref_ce, ref_kd = _reference_forward(features, meta_label, nodes, params)
    np.testing.assert_allclose(teacher_x, ref_tx, rtol=0.1, atol=0.05)
    np.testing.assert_allclose(teacher_loss, ref_ce, rtol=0.1, atol=0.05)
    np.testing.assert_allclose(kd_loss, ref_kd, rtol=0.1, atol=0.05)

    print("KERNEL_OK")
</pallas_src>

<mosaic_0001>
module attributes {stable_mosaic.version = 11 : i64} {
  func.func @kernel(%arg0: i32, %arg1: memref<8x32xbf16, #tpu.memory_space<vmem>>, %arg2: memref<8x1xi32, #tpu.memory_space<vmem>>, %arg3: memref<32x128xbf16, #tpu.memory_space<vmem>>, %arg4: memref<1x128xf32, #tpu.memory_space<vmem>>, %arg5: memref<64x8xbf16, #tpu.memory_space<vmem>>, %arg6: memref<1x8xf32, #tpu.memory_space<vmem>>, %arg7: memref<8x128xf32, #tpu.memory_space<vmem>>, %arg8: memref<8x1xf32, #tpu.memory_space<vmem>>, %arg9: memref<8x1xf32, #tpu.memory_space<vmem>>, %arg10: memref<8x1xf32, #tpu.memory_space<vmem>>) attributes {dimension_semantics = [#tpu.dimension_semantics<parallel>], iteration_bounds = array<i64: 1>, scalar_prefetch = 0 : i64, scratch_operands = 0 : i64, tpu.core_type = #tpu.core_type<tc>, window_params = [{transform_indices = @transform_0, window_bounds = array<i64: 8, 32>}, {transform_indices = @transform_1, window_bounds = array<i64: 8, 1>}, {pipeline_mode = #tpu.pipeline_mode<synchronous>, transform_indices = @transform_2, window_bounds = array<i64: 32, 128>}, {pipeline_mode = #tpu.pipeline_mode<synchronous>, transform_indices = @transform_3, window_bounds = array<i64: 1, 128>}, {pipeline_mode = #tpu.pipeline_mode<synchronous>, transform_indices = @transform_4, window_bounds = array<i64: 64, 8>}, {pipeline_mode = #tpu.pipeline_mode<synchronous>, transform_indices = @transform_5, window_bounds = array<i64: 1, 8>}, {transform_indices = @transform_6, window_bounds = array<i64: 8, 128>}, {transform_indices = @transform_7, window_bounds = array<i64: 8, 1>}, {transform_indices = @transform_8, window_bounds = array<i64: 8, 1>}, {transform_indices = @transform_9, window_bounds = array<i64: 8, 1>}]} {
    %c0 = arith.constant 0 : index
    %c0_0 = arith.constant 0 : index
    %0 = vector.load %arg1[%c0, %c0_0] : memref<8x32xbf16, #tpu.memory_space<vmem>>, vector<8x32xbf16>
    %c0_1 = arith.constant 0 : index
    %c0_2 = arith.constant 0 : index
    %1 = vector.load %arg3[%c0_1, %c0_2] : memref<32x128xbf16, #tpu.memory_space<vmem>>, vector<32x128xbf16>
    %cst = arith.constant dense<0.000000e+00> : vector<8x128xf32>
    %2 = tpu.matmul %0, %1, %cst {dimension_numbers = #tpu.dot_dimension_numbers<[1], [0], [0], [1], [0, 0, 1, 1], [], []>} : vector<8x32xbf16>, vector<32x128xbf16>, vector<8x128xf32> -> vector<8x128xf32>
    %c0_3 = arith.constant 0 : index
    %c0_4 = arith.constant 0 : index
    %3 = vector.load %arg4[%c0_3, %c0_4] : memref<1x128xf32, #tpu.memory_space<vmem>>, vector<1x128xf32>
    %4 = vector.broadcast %3 : vector<1x128xf32> to vector<8x128xf32>
    %5 = arith.addf %2, %4 : vector<8x128xf32>
    %cst_5 = arith.constant 0.000000e+00 : f32
    %6 = vector.broadcast %cst_5 : f32 to vector<8x128xf32>
    %7 = arith.maximumf %5, %6 : vector<8x128xf32>
    %c0_6 = arith.constant 0 : index
    %c0_7 = arith.constant 0 : index
    %8 = vector.load %arg7[%c0_6, %c0_7] : memref<8x128xf32, #tpu.memory_space<vmem>>, vector<8x128xf32>
    tpu.vector_store %arg7[%c0_6, %c0_7], %7 {strides = array<i32>} : memref<8x128xf32, #tpu.memory_space<vmem>>, vector<8x128xf32>,
    %9 = vector.extract_strided_slice %7 {offsets = [0, 0], sizes = [8, 64], strides = [1, 1]} : vector<8x128xf32> to vector<8x64xf32>
    %10 = vector.extract_strided_slice %7 {offsets = [0, 64], sizes = [8, 64], strides = [1, 1]} : vector<8x128xf32> to vector<8x64xf32>
    %c0_8 = arith.constant 0 : index
    %c0_9 = arith.constant 0 : index
    %11 = vector.load %arg5[%c0_8, %c0_9] : memref<64x8xbf16, #tpu.memory_space<vmem>>, vector<64x8xbf16>
    %c0_10 = arith.constant 0 : index
    %c0_11 = arith.constant 0 : index
    %12 = vector.load %arg6[%c0_10, %c0_11] : memref<1x8xf32, #tpu.memory_space<vmem>>, vector<1x8xf32>
    %13 = arith.truncf %9 : vector<8x64xf32> to vector<8x64xbf16>
    %cst_12 = arith.constant dense<0.000000e+00> : vector<8x8xf32>
    %14 = tpu.matmul %13, %11, %cst_12 {dimension_numbers = #tpu.dot_dimension_numbers<[1], [0], [0], [1], [0, 0, 1, 1], [], []>} : vector<8x64xbf16>, vector<64x8xbf16>, vector<8x8xf32> -> vector<8x8xf32>
    %15 = vector.broadcast %12 : vector<1x8xf32> to vector<8x8xf32>
    %16 = arith.addf %14, %15 : vector<8x8xf32>
    %17 = arith.truncf %10 : vector<8x64xf32> to vector<8x64xbf16>
    %cst_13 = arith.constant dense<0.000000e+00> : vector<8x8xf32>
    %18 = tpu.matmul %17, %11, %cst_13 {dimension_numbers = #tpu.dot_dimension_numbers<[1], [0], [0], [1], [0, 0, 1, 1], [], []>} : vector<8x64xbf16>, vector<64x8xbf16>, vector<8x8xf32> -> vector<8x8xf32>
    %19 = vector.broadcast %12 : vector<1x8xf32> to vector<8x8xf32>
    %20 = arith.addf %18, %19 : vector<8x8xf32>
    %cst_14 = arith.constant dense<0xFF800000> : vector<8xf32>
    %21 = vector.multi_reduction <maximumf>, %16, %cst_14 [1] : vector<8x8xf32> to vector<8xf32>
    %22 = vector.shape_cast %21 : vector<8xf32> to vector<8x1xf32>
    %cst_15 = arith.constant dense<0xFF800000> : vector<8xf32>
    %23 = vector.multi_reduction <maximumf>, %20, %cst_15 [1] : vector<8x8xf32> to vector<8xf32>
    %24 = vector.shape_cast %23 : vector<8xf32> to vector<8x1xf32>
    %25 = vector.broadcast %22 : vector<8x1xf32> to vector<8x8xf32>
    %26 = arith.subf %16, %25 : vector<8x8xf32>
    %27 = math.exp %26 : vector<8x8xf32>
    %28 = vector.broadcast %22 : vector<8x1xf32> to vector<8x8xf32>
    %29 = arith.subf %16, %28 : vector<8x8xf32>
    %cst_16 = arith.constant 5.000000e-01 : f32
    %30 = vector.broadcast %cst_16 : f32 to vector<8x8xf32>
    %31 = arith.mulf %30, %29 : vector<8x8xf32>
    %32 = math.exp %31 : vector<8x8xf32>
    %33 = vector.broadcast %24 : vector<8x1xf32> to vector<8x8xf32>
    %34 = arith.subf %20, %33 : vector<8x8xf32>
    %cst_17 = arith.constant 5.000000e-01 : f32
    %35 = vector.broadcast %cst_17 : f32 to vector<8x8xf32>
    %36 = arith.mulf %35, %34 : vector<8x8xf32>
    %37 = math.exp %36 : vector<8x8xf32>
    %cst_18 = arith.constant dense<0.000000e+00> : vector<8xf32>
    %38 = vector.multi_reduction <add>, %27, %cst_18 [1] : vector<8x8xf32> to vector<8xf32>
    %39 = vector.shape_cast %38 : vector<8xf32> to vector<8x1xf32>
    %40 = vector.broadcast %39 : vector<8x1xf32> to vector<8x8xf32>
    %41 = arith.divf %27, %40 : vector<8x8xf32>
    %cst_19 = arith.constant dense<0.000000e+00> : vector<8xf32>
    %42 = vector.multi_reduction <add>, %32, %cst_19 [1] : vector<8x8xf32> to vector<8xf32>
    %43 = vector.shape_cast %42 : vector<8xf32> to vector<8x1xf32>
    %44 = tpu.reciprocal %43 {approx = true} : vector<8x1xf32> -> vector<8x1xf32>
    %45 = vector.broadcast %44 : vector<8x1xf32> to vector<8x8xf32>
    %46 = arith.mulf %32, %45 : vector<8x8xf32>
    %cst_20 = arith.constant dense<0.000000e+00> : vector<8xf32>
    %47 = vector.multi_reduction <add>, %37, %cst_20 [1] : vector<8x8xf32> to vector<8xf32>
    %48 = vector.shape_cast %47 : vector<8xf32> to vector<8x1xf32>
    %49 = tpu.reciprocal %48 {approx = true} : vector<8x1xf32> -> vector<8x1xf32>
    %50 = vector.broadcast %49 : vector<8x1xf32> to vector<8x8xf32>
    %51 = arith.mulf %37, %50 : vector<8x8xf32>
    %cst_21 = arith.constant dense<0xFF800000> : vector<8xf32>
    %52 = vector.multi_reduction <maximumf>, %41, %cst_21 [1] : vector<8x8xf32> to vector<8xf32>
    %53 = vector.shape_cast %52 : vector<8xf32> to vector<8x1xf32>
    %54 = vector.broadcast %53 : vector<8x1xf32> to vector<8x8xf32>
    %55 = arith.subf %41, %54 : vector<8x8xf32>
    %56 = math.exp %55 : vector<8x8xf32>
    %cst_22 = arith.constant dense<0.000000e+00> : vector<8xf32>
    %57 = vector.multi_reduction <add>, %56, %cst_22 [1] : vector<8x8xf32> to vector<8xf32>
    %58 = vector.shape_cast %57 : vector<8xf32> to vector<8x1xf32>
    %59 = math.log %58 : vector<8x1xf32>
    %60 = vector.broadcast %59 : vector<8x1xf32> to vector<8x8xf32>
    %61 = arith.subf %55, %60 : vector<8x8xf32>
    %62 = tpu.iota {dimensions = array<i32: 1>} : vector<8x8xi32>
    %c0_23 = arith.constant 0 : index
    %c0_24 = arith.constant 0 : index
    %63 = vector.load %arg2[%c0_23, %c0_24] : memref<8x1xi32, #tpu.memory_space<vmem>>, vector<8x1xi32>
    %64 = vector.broadcast %63 : vector<8x1xi32> to vector<8x8xi32>
    %65 = arith.cmpi eq, %62, %64 : vector<8x8xi32>
    %66 = arith.extui %65 : vector<8x8xi1> to vector<8x8xi32>
    %67 = arith.sitofp %66 : vector<8x8xi32> to vector<8x8xf32>
    %68 = arith.mulf %67, %61 : vector<8x8xf32>
    %cst_25 = arith.constant dense<0.000000e+00> : vector<8xf32>
    %69 = vector.multi_reduction <add>, %68, %cst_25 [1] : vector<8x8xf32> to vector<8xf32>
    %70 = vector.shape_cast %69 : vector<8xf32> to vector<8x1xf32>
    %cst_26 = arith.constant 0.000000e+00 : f32
    %71 = vector.broadcast %cst_26 : f32 to vector<8x1xf32>
    %72 = arith.subf %71, %70 : vector<8x1xf32>
    %c0_27 = arith.constant 0 : index
    %c0_28 = arith.constant 0 : index
    %73 = vector.load %arg8[%c0_27, %c0_28] : memref<8x1xf32, #tpu.memory_space<vmem>>, vector<8x1xf32>
    tpu.vector_store %arg8[%c0_27, %c0_28], %72 {strides = array<i32>} : memref<8x1xf32, #tpu.memory_space<vmem>>, vector<8x1xf32>,
    %74 = arith.subf %46, %51 : vector<8x8xf32>
    %75 = math.absf %74 : vector<8x8xf32>
    %cst_29 = arith.constant dense<0.000000e+00> : vector<8xf32>
    %76 = vector.multi_reduction <add>, %75, %cst_29 [1] : vector<8x8xf32> to vector<8xf32>
    %77 = vector.shape_cast %76 : vector<8xf32> to vector<8x1xf32>
    %c0_30 = arith.constant 0 : index
    %c0_31 = arith.constant 0 : index
    %78 = vector.load %arg9[%c0_30, %c0_31] : memref<8x1xf32, #tpu.memory_space<vmem>>, vector<8x1xf32>
    tpu.vector_store %arg9[%c0_30, %c0_31], %77 {strides = array<i32>} : memref<8x1xf32, #tpu.memory_space<vmem>>, vector<8x1xf32>,
    %79 = arith.subf %10, %9 : vector<8x64xf32>
    %80 = arith.mulf %79, %79 : vector<8x64xf32>
    %cst_32 = arith.constant dense<0.000000e+00> : vector<8xf32>
    %81 = vector.multi_reduction <add>, %80, %cst_32 [1] : vector<8x64xf32> to vector<8xf32>
    %82 = vector.shape_cast %81 : vector<8xf32> to vector<8x1xf32>
    %c0_33 = arith.constant 0 : index
    %c0_34 = arith.constant 0 : index
    %83 = vector.load %arg10[%c0_33, %c0_34] : memref<8x1xf32, #tpu.memory_space<vmem>>, vector<8x1xf32>
    tpu.vector_store %arg10[%c0_33, %c0_34], %82 {strides = array<i32>} : memref<8x1xf32, #tpu.memory_space<vmem>>, vector<8x1xf32>,
    return
  }
  func.func @transform_0(%arg0: i32) -> (i32, i32) {
    %c0_i32 = arith.constant 0 : i32
    %c0_i32_0 = arith.constant 0 : i32
    return %arg0, %c0_i32 : i32, i32
  }
  func.func @transform_1(%arg0: i32) -> (i32, i32) {
    %c0_i32 = arith.constant 0 : i32
    %c0_i32_0 = arith.constant 0 : i32
    return %arg0, %c0_i32 : i32, i32
  }
  func.func @transform_2(%arg0: i32) -> (i32, i32) {
    %c0_i32 = arith.constant 0 : i32
    %c0_i32_0 = arith.constant 0 : i32
    %c0_i32_1 = arith.constant 0 : i32
    return %c0_i32, %c0_i32_0 : i32, i32
  }
  func.func @transform_3(%arg0: i32) -> (i32, i32) {
    %c0_i32 = arith.constant 0 : i32
    %c0_i32_0 = arith.constant 0 : i32
    %c0_i32_1 = arith.constant 0 : i32
    return %c0_i32, %c0_i32_0 : i32, i32
  }
  func.func @transform_4(%arg0: i32) -> (i32, i32) {
    %c0_i32 = arith.constant 0 : i32
    %c0_i32_0 = arith.constant 0 : i32
    %c0_i32_1 = arith.constant 0 : i32
    return %c0_i32, %c0_i32_0 : i32, i32
  }
  func.func @transform_5(%arg0: i32) -> (i32, i32) {
    %c0_i32 = arith.constant 0 : i32
    %c0_i32_0 = arith.constant 0 : i32
    %c0_i32_1 = arith.constant 0 : i32
    return %c0_i32, %c0_i32_0 : i32, i32
  }
  func.func @transform_6(%arg0: i32) -> (i32, i32) {
    %c0_i32 = arith.constant 0 : i32
    %c0_i32_0 = arith.constant 0 : i32
    return %arg0, %c0_i32 : i32, i32
  }
  func.func @transform_7(%arg0: i32) -> (i32, i32) {
    %c0_i32 = arith.constant 0 : i32
    %c0_i32_0 = arith.constant 0 : i32
    return %arg0, %c0_i32 : i32, i32
  }
  func.func @transform_8(%arg0: i32) -> (i32, i32) {
    %c0_i32 = arith.constant 0 : i32
    %c0_i32_0 = arith.constant 0 : i32
    return %arg0, %c0_i32 : i32, i32
  }
  func.func @transform_9(%arg0: i32) -> (i32, i32) {
    %c0_i32 = arith.constant 0 : i32
    %c0_i32_0 = arith.constant 0 : i32
    return %arg0, %c0_i32 : i32, i32
  }
}

</mosaic_0001>

<llo_original>
// kernel: feature_extractor_forward.1
$region0: #{feature_extractor_forward.1}
  #allocation0 [shape = 'u32[]', space=smem, size = 0x4, offset = 0x4, fixed_abs, tag = 'smem constant byte address 0x4 - core index']
  #allocation1 [shape = 'u32[144,128]{1,0:T(1,128)}', space=vmem, size = 0x12000, scoped, tag = 'internal scratch']
  %s0 = inlined_call_operand.vmem [shape: bf16[8,32], index: 0, kind: input, shape index: {}]
  %s1 = inlined_call_operand.vmem [shape: s32[8,1], index: 1, kind: input, shape index: {}]
  %s2 = inlined_call_operand.vmem [shape: bf16[32,128], index: 2, kind: input, shape index: {}]
  %s3 = inlined_call_operand.vmem [shape: f32[1,128], index: 3, kind: input, shape index: {}]
  %s4 = inlined_call_operand.vmem [shape: bf16[64,8], index: 4, kind: input, shape index: {}]
  %s5 = inlined_call_operand.vmem [shape: f32[1,8], index: 5, kind: input, shape index: {}]
  %s6 = inlined_call_operand.hbm [shape: f32[8,128], index: 6, kind: output, shape index: {0}]
  %s7 = inlined_call_operand.vmem [shape: f32[8,1], index: 7, kind: output, shape index: {1}]
  %s8 = inlined_call_operand.vmem [shape: f32[8,1], index: 8, kind: output, shape index: {2}]
  %s9 = inlined_call_operand.vmem [shape: f32[8,1], index: 9, kind: output, shape index: {3}]
  %10 = xla_tuple %s6, %s7, %s8, %s9
  %s11 = sld [smem:[#allocation0]]
  $region58: #{feature_extractor_forward.1} parent=0
    _
  %s13 = ssub.s32 1, %s11
  %s14 = scalar_select 0, %s13, %s11
  $region1: #{feature_extractor_forward.1} parent=0
    #allocation2 [shape = 'u8[4096]{0}', space=vmem, size = 0x1000, scoped, tag = 'output window, operand 0, single buffered']
    #allocation3 [shape = 's32[1]{0}', space=sflag, size = 0x4, scoped, tag = 'scoped memory for feature_extractor_forward.1']
    %15 = vsyncpa [#allocation3], 0
    // Predicated region
    $region2: #{feature_extractor_forward.1} parent=1 // pred_check
      _
    $region3: #{feature_extractor_forward.1} parent=1 // pred_check_branch
      %17 = sbr.rel (0) target = $region5
    $region4: #{feature_extractor_forward.1} parent=1 // pred_region
      _
    $region5: #{feature_extractor_forward.1} parent=1 // pred_fallthru
      _
    // Predicated region
    $region6: #{feature_extractor_forward.1} parent=1 // pred_check
      _
    $region7: #{feature_extractor_forward.1} parent=1 // pred_check_branch
      %19 = sbr.rel (0) target = $region9
    $region8: #{feature_extractor_forward.1} parent=1 // pred_region
      _
    $region9: #{feature_extractor_forward.1} parent=1 // pred_fallthru
      _
    // Predicated region
    $region10: #{feature_extractor_forward.1} parent=1 // pred_check
      _
    $region11: #{feature_extractor_forward.1} parent=1 // pred_check_branch
      %21 = sbr.rel (0) target = $region13
    $region12: #{feature_extractor_forward.1} parent=1 // pred_region
      _
    $region13: #{feature_extractor_forward.1} parent=1 // pred_fallthru
      _
    // Predicated region
    $region14: #{feature_extractor_forward.1} parent=1 // pred_check
      _
    $region15: #{feature_extractor_forward.1} parent=1 // pred_check_branch
      %23 = sbr.rel (0) target = $region17
    $region16: #{feature_extractor_forward.1} parent=1 // pred_region
      _
    $region17: #{feature_extractor_forward.1} parent=1 // pred_fallthru
      _
    // Predicated region
    $region18: #{feature_extractor_forward.1} parent=1 // pred_check
      _
    $region19: #{feature_extractor_forward.1} parent=1 // pred_check_branch
      %25 = sbr.rel (0) target = $region21
    $region20: #{feature_extractor_forward.1} parent=1 // pred_region
      _
    $region21: #{feature_extractor_forward.1} parent=1 // pred_fallthru
      _
    // Predicated region
    $region22: #{feature_extractor_forward.1} parent=1 // pred_check
      _
    $region23: #{feature_extractor_forward.1} parent=1 // pred_check_branch
      %27 = sbr.rel (0) target = $region25
    $region24: #{feature_extractor_forward.1} parent=1 // pred_region
      _
    $region25: #{feature_extractor_forward.1} parent=1 // pred_fallthru
      _
    %v29 = vld [vmem:[%s0] sm:$0xf]
    %v30 = vld [vmem:[%s2] sm:$0xf]
    %v31 = vld [vmem:[%s2 + $0x4] sm:$0xf]
    %v32 = vld [vmem:[%s2 + $0x8] sm:$0xf]
    %v33 = vld [vmem:[%s2 + $0xc] sm:$0xf]
    %v34 = vld [vmem:[%s3] sm:$0x1]
    %v36 = vlaneseq
    %v37 = vshrl.u32 %v36, 7
    %v38 = vsub.s32 0, %v37
    %v39 = vrot.slane %v34, %v38
    %v45 = vunpack.c.l.b16 %v30
    %v46 = vunpack.c.l.b16 %v31
    %v47 = vunpack.c.l.b16 %v32
    %v48 = vunpack.c.l.b16 %v33
    %v49 = vpack.c.b16 %v46, %v45
    %v50 = vpack.c.b16 %v48, %v47
    %vm53 = vcmask 261120
    %v55 = vsel %vm53, %v29, 0
    %57 = vmatprep.subr.bf16.mxu0 0
    %58 = vmatpush1.bf16.msra.mxu0 0
    %59 = vmatprep.subr.bf16.mxu0 0
    %60 = vmatpush1.bf16.msra.mxu0 0
    %61 = vmatprep.subr.bf16.mxu0 0
    %62 = vmatpush1.bf16.msra.mxu0 0
    %63 = vmatprep.subr.bf16.mxu0 0
    %64 = vmatpush1.bf16.msra.mxu0 0
    %65 = vmatprep.subr.bf16.mxu0 0
    %66 = vmatpush1.bf16.msra.mxu0 0
    %67 = vmatprep.subr.bf16.mxu0 0
    %68 = vmatpush1.bf16.msra.mxu0 0
    %69 = vmatprep.subr.bf16.mxu0 0
    %70 = vmatpush1.bf16.msra.mxu0 %v50
    %71 = vmatprep.subr.bf16.mxu0 0
    %72 = vmatpush1.bf16.msra.mxu0 %v49
    %73 = vmatprep.subr.bf16.mxu0 0
    %74 = vmatpush2.bf16.msra.mxu0 0
    %75 = vmatprep.subr.bf16.mxu0 0
    %76 = vmatpush2.bf16.msra.mxu0 0
    %77 = vmatprep.subr.bf16.mxu0 0
    %78 = vmatpush2.bf16.msra.mxu0 0
    %79 = vmatprep.subr.bf16.mxu0 0
    %80 = vmatpush2.bf16.msra.mxu0 0
    %81 = vmatprep.subr.bf16.mxu0 0
    %82 = vmatpush2.bf16.msra.mxu0 0
    %83 = vmatprep.subr.bf16.mxu0 0
    %84 = vmatpush2.bf16.msra.mxu0 0
    %85 = vmatprep.subr.bf16.mxu0 0
    %86 = vmatpush2.bf16.msra.mxu0 0
    %87 = vmatprep.subr.bf16.mxu0 0
    %88 = vmatpush2.bf16.msra.mxu0 0
    %89 = vmatprep.mubr.bf16.mxu0 0
    %90 = vmatmul.mubr.bf16.gmra.mxu0 %v55
    %v91 = vpop.f32.mrf.mxu0
    %v92 = vadd.f32 %v39, %v91
    %v93 = vpop.f32.mrf.mxu0
    %v94 = vpop.f32.mrf.mxu0
    %v95 = vpop.f32.mrf.mxu0
    %96 = vdwg.mxu0
    %v97 = vmax.f32 %v92, 0.0
    %98 = vst [vmem:[#allocation2] sm:$0xff] %v97
    %v99 = vld [vmem:[%s4] sm:$0xf]
    %v100 = vld [vmem:[%s4 + $0x4] sm:$0xf]
    %v101 = vld [vmem:[%s4 + $0x8] sm:$0xf]
    %v102 = vld [vmem:[%s4 + $0xc] sm:$0xf]
    %v103 = vld [vmem:[%s4 + $0x10] sm:$0xf]
    %v104 = vld [vmem:[%s4 + $0x14] sm:$0xf]
    %v105 = vld [vmem:[%s4 + $0x18] sm:$0xf]
    %v106 = vld [vmem:[%s4 + $0x1c] sm:$0xf]
    %v107 = vld [vmem:[%s5] sm:$0x1]
    %v108 = vpack.c.bf16 %v97, %v97
    %v110 = vlaneseq
    %v111 = vshrl.u32 %v110, 7
    %v112 = vsub.s32 0, %v111
    %v113 = vrot.slane %v107, %v112
    %v123 = vunpack.c.l.b16 %v99
    %v124 = vunpack.c.l.b16 %v100
    %v125 = vunpack.c.l.b16 %v101
    %v126 = vunpack.c.l.b16 %v102
    %v127 = vunpack.c.l.b16 %v103
    %v128 = vunpack.c.l.b16 %v104
    %v129 = vunpack.c.l.b16 %v105
    %v130 = vunpack.c.l.b16 %v106
    %v131 = vpack.c.b16 %v124, %v123
    %v132 = vpack.c.b16 %v126, %v125
    %v133 = vpack.c.b16 %v128, %v127
    %v134 = vpack.c.b16 %v130, %v129
    %vm139 = vcmask 523264
    %v141 = vsel %vm139, %v108, 0
    %143 = vmatprep.subr.bf16.mxu0 0
    %144 = vmatpush1.bf16.msra.mxu0 0
    %145 = vmatprep.subr.bf16.mxu0 0
    %146 = vmatpush1.bf16.msra.mxu0 0
    %147 = vmatprep.subr.bf16.mxu0 0
    %148 = vmatpush1.bf16.msra.mxu0 0
    %149 = vmatprep.subr.bf16.mxu0 0
    %150 = vmatpush1.bf16.msra.mxu0 0
    %151 = vmatprep.subr.bf16.mxu0 0
    %152 = vmatpush1.bf16.msra.mxu0 %v134
    %153 = vmatprep.subr.bf16.mxu0 0
    %154 = vmatpush1.bf16.msra.mxu0 %v133
    %155 = vmatprep.subr.bf16.mxu0 0
    %156 = vmatpush1.bf16.msra.mxu0 %v132
    %157 = vmatprep.subr.bf16.mxu0 0
    %158 = vmatpush1.bf16.msra.mxu0 %v131
    %159 = vmatprep.subr.bf16.mxu0 0
    %160 = vmatpush2.bf16.msra.mxu0 0
    %161 = vmatprep.subr.bf16.mxu0 0
    %162 = vmatpush2.bf16.msra.mxu0 0
    %163 = vmatprep.subr.bf16.mxu0 0
    %164 = vmatpush2.bf16.msra.mxu0 0
    %165 = vmatprep.subr.bf16.mxu0 0
    %166 = vmatpush2.bf16.msra.mxu0 0
    %167 = vmatprep.subr.bf16.mxu0 0
    %168 = vmatpush2.bf16.msra.mxu0 0
    %169 = vmatprep.subr.bf16.mxu0 0
    %170 = vmatpush2.bf16.msra.mxu0 0
    %171 = vmatprep.subr.bf16.mxu0 0
    %172 = vmatpush2.bf16.msra.mxu0 0
    %173 = vmatprep.subr.bf16.mxu0 0
    %174 = vmatpush2.bf16.msra.mxu0 0
    %175 = vmatprep.mubr.bf16.mxu0 0
    %176 = vmatmul.mubr.bf16.gmra.mxu0 %v141
    %v177 = vpop.f32.mrf.mxu0
    %v178 = vadd.f32 %v113, %v177
    %v179 = vpop.f32.mrf.mxu0
    %v180 = vpop.f32.mrf.mxu0
    %v181 = vpop.f32.mrf.mxu0
    %182 = vdwg.mxu0
    %184 = vrot.lane.b32.xlu0 %v108, 64
    %v185 = vpop.permute.xlu0 %184
    %v187 = vsel %vm139, %v185, 0
    %189 = vmatprep.subr.bf16.mxu0 0
    %190 = vmatpush1.bf16.msra.mxu0 0
    %191 = vmatprep.subr.bf16.mxu0 0
    %192 = vmatpush1.bf16.msra.mxu0 0
    %193 = vmatprep.subr.bf16.mxu0 0
    %194 = vmatpush1.bf16.msra.mxu0 0
    %195 = vmatprep.subr.bf16.mxu0 0
    %196 = vmatpush1.bf16.msra.mxu0 0
    %197 = vmatprep.subr.bf16.mxu0 0
    %198 = vmatpush1.bf16.msra.mxu0 %v134
    %199 = vmatprep.subr.bf16.mxu0 0
    %200 = vmatpush1.bf16.msra.mxu0 %v133
    %201 = vmatprep.subr.bf16.mxu0 0
    %202 = vmatpush1.bf16.msra.mxu0 %v132
    %203 = vmatprep.subr.bf16.mxu0 0
    %204 = vmatpush1.bf16.msra.mxu0 %v131
    %205 = vmatprep.subr.bf16.mxu0 0
    %206 = vmatpush2.bf16.msra.mxu0 0
    %207 = vmatprep.subr.bf16.mxu0 0
    %208 = vmatpush2.bf16.msra.mxu0 0
    %209 = vmatprep.subr.bf16.mxu0 0
    %210 = vmatpush2.bf16.msra.mxu0 0
    %211 = vmatprep.subr.bf16.mxu0 0
    %212 = vmatpush2.bf16.msra.mxu0 0
    %213 = vmatprep.subr.bf16.mxu0 0
    %214 = vmatpush2.bf16.msra.mxu0 0
    %215 = vmatprep.subr.bf16.mxu0 0
    %216 = vmatpush2.bf16.msra.mxu0 0
    %217 = vmatprep.subr.bf16.mxu0 0
    %218 = vmatpush2.bf16.msra.mxu0 0
    %219 = vmatprep.subr.bf16.mxu0 0
    %220 = vmatpush2.bf16.msra.mxu0 0
    %221 = vmatprep.mubr.bf16.mxu0 0
    %222 = vmatmul.mubr.bf16.gmra.mxu0 %v187
    %v223 = vpop.f32.mrf.mxu0
    %v224 = vadd.f32 %v113, %v223
    %v225 = vpop.f32.mrf.mxu0
    %v226 = vpop.f32.mrf.mxu0
    %v227 = vpop.f32.mrf.mxu0
    %228 = vdwg.mxu0
    %vm229 = vcmask 64512
    %v230 = vsel %vm229, %v178, -inf
    %231 = vmax.xlane.f32.xlu0 %v230
    %v232 = vpop.xlane.xlu0 %231
    %v233 = vsel %vm229, %v224, -inf
    %234 = vmax.xlane.f32.xlu0 %v233
    %v235 = vpop.xlane.xlu0 %234
    %v236 = vsub.f32 %v178, %v232
    %v237 = vmul.f32 %v236, 1.442695
    %v238 = vpow.pop %v237
    %v239 = vmul.f32 %v236, 0.5
    %v240 = vmul.f32 %v239, 1.442695
    %v241 = vpow.pop %v240
    %v242 = vsub.f32 %v224, %v235
    %v243 = vmul.f32 %v242, 0.5
    %v244 = vmul.f32 %v243, 1.442695
    %v245 = vpow.pop %v244
    %v246 = vsel %vm229, %v238, 0.0
    %247 = vadd.xlane.f32.xlu0 %v246
    %v248 = vpop.xlane.xlu0 %247
    %v249 = vrcp.pop %v248
    %v250 = vmul.f32 %v238, %v249
    %v251 = vsel %vm229, %v241, 0.0
    %252 = vadd.xlane.f32.xlu0 %v251
    %v253 = vpop.xlane.xlu0 %252
    %v254 = vrcp.pop %v253
    %v255 = vmul.f32 %v241, %v254
    %v256 = vsel %vm229, %v245, 0.0
    %257 = vadd.xlane.f32.xlu0 %v256
    %v258 = vpop.xlane.xlu0 %257
    %v259 = vrcp.pop %v258
    %v260 = vmul.f32 %v245, %v259
    %v261 = vsel %vm229, %v250, -inf
    %262 = vmax.xlane.f32.xlu0 %v261
    %v263 = vpop.xlane.xlu0 %262
    %v264 = vsub.f32 %v250, %v263
    %v265 = vmul.f32 %v264, 1.442695
    %v266 = vpow.pop %v265
    %v267 = vsel %vm229, %v266, 0.0
    %268 = vadd.xlane.f32.xlu0 %v267
    %v269 = vpop.xlane.xlu0 %268
    %v270 = vlog2.pop %v269
    %v271 = vmul.f32 %v270, 0.6931472
    %v272 = vsub.f32 %v264, %v271
    %v273 = vlaneseq
    %v274 = vand.u32 %v273, 127
    %v275 = vld [vmem:[%s1] sm:$0xff]
    %276 = vset.pattern.permute.xlu0 0
    %277 = vperm.xlu0 %276, %v275
    %v278 = vpop.permute.xlu0 %277
    %vm279 = vcmp.eq.s32.totalorder %v274, %v278
    %v280 = vsel %vm279, 1, 0
    %v281 = vcvt.s32.f32 %v280
    %v282 = vmul.f32 %v281, %v272
    %v283 = vsel %vm229, %v282, 0.0
    %284 = vadd.xlane.f32.xlu0 %v283
    %v285 = vpop.xlane.xlu0 %284
    %v286 = vsub.f32 0.0, %v285
    %vm287 = vcmask 7168
    %288 = vst.msk [vmem:[%s7] sm:$0xff] %vm287, %v286
    %v289 = vsub.f32 %v255, %v260
    %v290 = vand.u32 2147483647, %v289
    %v291 = vsel %vm229, %v290, 0.0
    %292 = vadd.xlane.f32.xlu0 %v291
    %v293 = vpop.xlane.xlu0 %292
    %294 = vst.msk [vmem:[%s8] sm:$0xff] %vm287, %v293
    %296 = vrot.lane.b32.xlu0 %v97, 64
    %v297 = vpop.permute.xlu0 %296
    %v299 = vsub.f32 %v97, %v297
    %v300 = vmul.f32 %v299, %v299
    %302 = vrot.lane.b32.xlu0 %v300, 64
    %v303 = vpop.permute.xlu0 %302
    %v305 = vsel %vm139, %v303, 0.0
    %306 = vadd.xlane.f32.xlu0 %v305
    %v307 = vpop.xlane.xlu0 %306
    %308 = vst.msk [vmem:[%s9] sm:$0xff] %vm287, %v307
    // Predicated region
    $region26: #{feature_extractor_forward.1} parent=1 // pred_check
      _
    $region27: #{feature_extractor_forward.1} parent=1 // pred_check_branch
      %310 = sbr.rel (0) target = $region29
    $region28: #{feature_extractor_forward.1} parent=1 // pred_region
      %s312 = ssub.s32 128, 128
      %313 = vsyncadd [#allocation3], %s312
      %s315 = sshll.u32 [#allocation2], 4
      %s316 = int_to_ptr.vmem [resolvable:$true] %s315
      %318 = dma.vmem_to_hbm [thread:$0]  %s316, 128, %s6, [#allocation3]
    $region29: #{feature_extractor_forward.1} parent=1 // pred_fallthru
      _
    // Predicated region
    $region30: #{feature_extractor_forward.1} parent=1 // pred_check
      _
    $region31: #{feature_extractor_forward.1} parent=1 // pred_check_branch
      %320 = sbr.rel (0) target = $region33
    $region32: #{feature_extractor_forward.1} parent=1 // pred_region
      _
    $region33: #{feature_extractor_forward.1} parent=1 // pred_fallthru
      _
    // Predicated region
    $region34: #{feature_extractor_forward.1} parent=1 // pred_check
      _
    $region35: #{feature_extractor_forward.1} parent=1 // pred_check_branch
      %322 = sbr.rel (0) target = $region37
    $region36: #{feature_extractor_forward.1} parent=1 // pred_region
      _
    $region37: #{feature_extractor_forward.1} parent=1 // pred_fallthru
      _
    // Predicated region
    $region38: #{feature_extractor_forward.1} parent=1 // pred_check
      _
    $region39: #{feature_extractor_forward.1} parent=1 // pred_check_branch
      %324 = sbr.rel (0) target = $region41
    $region40: #{feature_extractor_forward.1} parent=1 // pred_region
      _
    $region41: #{feature_extractor_forward.1} parent=1 // pred_fallthru
      _
    // Predicated region
    $region42: #{feature_extractor_forward.1} parent=1 // pred_check
      _
    $region43: #{feature_extractor_forward.1} parent=1 // pred_check_branch
      %326 = sbr.rel (0) target = $region45
    $region44: #{feature_extractor_forward.1} parent=1 // pred_region
      %327 = dma.done [#allocation3], 128
    $region45: #{feature_extractor_forward.1} parent=1 // pred_fallthru
      _
    // Predicated region
    $region46: #{feature_extractor_forward.1} parent=1 // pred_check
      _
    $region47: #{feature_extractor_forward.1} parent=1 // pred_check_branch
      %329 = sbr.rel (0) target = $region49
    $region48: #{feature_extractor_forward.1} parent=1 // pred_region
      _
    $region49: #{feature_extractor_forward.1} parent=1 // pred_fallthru
      _
    // Predicated region
    $region50: #{feature_extractor_forward.1} parent=1 // pred_check
      _
    $region51: #{feature_extractor_forward.1} parent=1 // pred_check_branch
      %331 = sbr.rel (0) target = $region53
    $region52: #{feature_extractor_forward.1} parent=1 // pred_region
      _
    $region53: #{feature_extractor_forward.1} parent=1 // pred_fallthru
      _
    // Predicated region
    $region54: #{feature_extractor_forward.1} parent=1 // pred_check
      _
    $region55: #{feature_extractor_forward.1} parent=1 // pred_check_branch
      %333 = sbr.rel (0) target = $region57
    $region56: #{feature_extractor_forward.1} parent=1 // pred_region
      _
    $region57: #{feature_extractor_forward.1} parent=1 // pred_fallthru
      _
    %334 = vsyncpa [#allocation3], 1

</llo_original>
